<compile_context>
chip_gen: v7x
topology: tpu7x:2x2x1
jax: 0.10.0
libtpu: 0.0.40
codegen_flags: <defaults>
</compile_context>

<pallas_src>
import functools

import jax
import jax.numpy as jnp
from jax.experimental import pallas as pl
from jax.experimental.pallas import tpu as pltpu


def _round_up(x: int, m: int) -> int:
    return ((x + m - 1) // m) * m


def ranker_kernel(x_ref, w_ref, b_ref, o_ref):
    """One batch tile of: concat-Linear  ==  x @ W.T + b  (W in [C_out, 3C_in])."""
    # Single MXU contraction with K = 3*C; contract x's last axis against the
    # weight's last axis (native nn.Linear layout, no transpose needed).
    acc = jax.lax.dot_general(
        x_ref[...],                      # [TB, 3C]   (compute dtype, e.g. bf16)
        w_ref[...],                      # [C_pad, 3C]
        dimension_numbers=(((1,), (1,)), ((), ())),
        preferred_element_type=jnp.float32,
    )                                     # [TB, C_pad] f32 accumulator
    o_ref[...] = (acc + b_ref[...]).astype(o_ref.dtype)


@functools.partial(jax.jit, static_argnames=("block_b", "compute_dtype"))
def ranker_forward(eff, inc, res, weight, bias, *,
                   block_b: int = 128,
                   compute_dtype=jnp.bfloat16):
    """Equivalent of Ranker.forward.

    eff, inc, res : [B, C]      (any float dtype; output matches eff.dtype)
    weight        : [C, 3C]     PyTorch nn.Linear layout (out_features, in_features)
    bias          : [C]
    """
    B, C = eff.shape
    K = 3 * C
    out_dtype = eff.dtype

    # ---- wrapper-side layout prep (one pass each, no weight transpose) ------
    # Fuse the three inputs along the contraction (lane) axis once.
    x = jnp.concatenate([eff, inc, res], axis=1)            # [B, 3C]

    # Lane-dense output: pad the class dim up to a multiple of 128.
    C_pad = _round_up(max(C, 128), 128)
    w = jnp.pad(weight, ((0, C_pad - C), (0, 0)))            # [C_pad, 3C]
    b2d = jnp.pad(bias, (0, C_pad - C)).reshape(1, C_pad)    # [1, C_pad] (kept f32)

    # Batch tile: multiple of 8 (sublane rule).  For large C / v7x's 64 MiB
    # VMEM, shrink block_b so  (resident bf16 weight) + 2x double-buffered
    # (x + out) tiles stay within the scoped VMEM budget.
    TB = min(block_b, _round_up(B, 8))
    B_pad = _round_up(B, TB)
    x = jnp.pad(x, ((0, B_pad - B), (0, 0)))

    # bf16 compute path for the MXU (f32 accumulation inside the kernel).
    x = x.astype(compute_dtype)
    w = w.astype(compute_dtype)
    b2d = b2d.astype(jnp.float32)

    grid = (B_pad // TB,)

    out_padded = pl.pallas_call(
        ranker_kernel,
        out_shape=jax.ShapeDtypeStruct((B_pad, C_pad), out_dtype),
        grid_spec=pltpu.PrefetchScalarGridSpec(
            num_scalar_prefetch=0,
            grid=grid,
            in_specs=[
                # Activations stream per batch tile (auto double-buffered).
                pl.BlockSpec((TB, K), lambda i: (i, 0)),
                # Weight and bias resident in VMEM across all grid steps.
                pl.BlockSpec((C_pad, K), lambda i: (0, 0)),
                pl.BlockSpec((1, C_pad), lambda i: (0, 0)),
            ],
            out_specs=pl.BlockSpec((TB, C_pad), lambda i: (i, 0)),
        ),
        compiler_params=pltpu.CompilerParams(
            dimension_semantics=("parallel",),
        ),
    )(x, w, b2d)

    # Strip batch / lane padding.
    return out_padded[:B, :C]


if __name__ == "__main__":
    num_classes = 8
    batch = 4

    key = jax.random.PRNGKey(0)
    k_eff, k_inc, k_res, k_w, k_b = jax.random.split(key, 5)

    eff = jax.random.normal(k_eff, (batch, num_classes), dtype=jnp.float32)
    inc = jax.random.normal(k_inc, (batch, num_classes), dtype=jnp.float32)
    res = jax.random.normal(k_res, (batch, num_classes), dtype=jnp.float32)

    # Deterministic "parameters" mimicking nn.Linear(3*C, C) init shapes.
    fan_in = 3 * num_classes
    bound = 1.0 / jnp.sqrt(fan_in)
    weight = jax.random.uniform(k_w, (num_classes, 3 * num_classes),
                                minval=-bound, maxval=bound, dtype=jnp.float32)
    bias = jax.random.uniform(k_b, (num_classes,),
                              minval=-bound, maxval=bound, dtype=jnp.float32)

    out = ranker_forward(eff, inc, res, weight, bias)
    out = jax.block_until_ready(out)

    # Pure-JAX f32 reference: Linear(cat([eff, inc, res], axis=1))
    ref = jnp.concatenate([eff, inc, res], axis=1) @ weight.T + bias
    assert out.shape == (batch, num_classes)
    # Tolerance loosened for the bf16 compute path (f32 accumulation).
    assert jnp.allclose(out, ref, atol=5e-2, rtol=5e-2), (
        f"max abs err = {jnp.max(jnp.abs(out - ref))}")

    print("KERNEL_OK")
</pallas_src>

<mosaic_0001>
module attributes {stable_mosaic.version = 11 : i64} {
  func.func @ranker_kernel(%arg0: i32, %arg1: memref<8x24xbf16, #tpu.memory_space<vmem>>, %arg2: memref<128x24xbf16, #tpu.memory_space<vmem>>, %arg3: memref<1x128xf32, #tpu.memory_space<vmem>>, %arg4: memref<8x128xf32, #tpu.memory_space<vmem>>) attributes {dimension_semantics = [#tpu.dimension_semantics<parallel>], iteration_bounds = array<i64: 1>, scalar_prefetch = 0 : i64, scratch_operands = 0 : i64, tpu.core_type = #tpu.core_type<tc>, window_params = [{transform_indices = @transform_0, window_bounds = array<i64: 8, 24>}, {pipeline_mode = #tpu.pipeline_mode<synchronous>, transform_indices = @transform_1, window_bounds = array<i64: 128, 24>}, {pipeline_mode = #tpu.pipeline_mode<synchronous>, transform_indices = @transform_2, window_bounds = array<i64: 1, 128>}, {transform_indices = @transform_3, window_bounds = array<i64: 8, 128>}]} {
    %c0 = arith.constant 0 : index
    %c0_0 = arith.constant 0 : index
    %0 = vector.load %arg1[%c0, %c0_0] : memref<8x24xbf16, #tpu.memory_space<vmem>>, vector<8x24xbf16>
    %c0_1 = arith.constant 0 : index
    %c0_2 = arith.constant 0 : index
    %1 = vector.load %arg2[%c0_1, %c0_2] : memref<128x24xbf16, #tpu.memory_space<vmem>>, vector<128x24xbf16>
    %cst = arith.constant dense<0.000000e+00> : vector<8x128xf32>
    %2 = tpu.matmul %0, %1, %cst {dimension_numbers = #tpu.dot_dimension_numbers<[1], [1], [0], [0], [0, 0, 1, 0], [], []>} : vector<8x24xbf16>, vector<128x24xbf16>, vector<8x128xf32> -> vector<8x128xf32>
    %c0_3 = arith.constant 0 : index
    %c0_4 = arith.constant 0 : index
    %3 = vector.load %arg3[%c0_3, %c0_4] : memref<1x128xf32, #tpu.memory_space<vmem>>, vector<1x128xf32>
    %4 = vector.broadcast %3 : vector<1x128xf32> to vector<8x128xf32>
    %5 = arith.addf %2, %4 : vector<8x128xf32>
    %c0_5 = arith.constant 0 : index
    %c0_6 = arith.constant 0 : index
    %6 = vector.load %arg4[%c0_5, %c0_6] : memref<8x128xf32, #tpu.memory_space<vmem>>, vector<8x128xf32>
    tpu.vector_store %arg4[%c0_5, %c0_6], %5 {strides = array<i32>} : memref<8x128xf32, #tpu.memory_space<vmem>>, vector<8x128xf32>,
    return
  }
  func.func @transform_0(%arg0: i32) -> (i32, i32) {
    %c0_i32 = arith.constant 0 : i32
    %c0_i32_0 = arith.constant 0 : i32
    return %arg0, %c0_i32 : i32, i32
  }
  func.func @transform_1(%arg0: i32) -> (i32, i32) {
    %c0_i32 = arith.constant 0 : i32
    %c0_i32_0 = arith.constant 0 : i32
    %c0_i32_1 = arith.constant 0 : i32
    return %c0_i32, %c0_i32_0 : i32, i32
  }
  func.func @transform_2(%arg0: i32) -> (i32, i32) {
    %c0_i32 = arith.constant 0 : i32
    %c0_i32_0 = arith.constant 0 : i32
    %c0_i32_1 = arith.constant 0 : i32
    return %c0_i32, %c0_i32_0 : i32, i32
  }
  func.func @transform_3(%arg0: i32) -> (i32, i32) {
    %c0_i32 = arith.constant 0 : i32
    %c0_i32_0 = arith.constant 0 : i32
    return %arg0, %c0_i32 : i32, i32
  }
}

</mosaic_0001>

<llo_original>
// kernel: ranker_forward.1
$region0: #{ranker_forward.1}
  #allocation0 [shape = 'u32[]', space=smem, size = 0x4, offset = 0x4, fixed_abs, tag = 'smem constant byte address 0x4 - core index']
  #allocation1 [shape = 'u32[144,128]{1,0:T(1,128)}', space=vmem, size = 0x12000, scoped, tag = 'internal scratch']
  %s0 = inlined_call_operand.vmem [shape: bf16[8,24], index: 0, kind: input, shape index: {}]
  %s1 = inlined_call_operand.vmem [shape: bf16[128,24], index: 1, kind: input, shape index: {}]
  %s2 = inlined_call_operand.vmem [shape: f32[1,128], index: 2, kind: input, shape index: {}]
  %s3 = inlined_call_operand.vmem [shape: f32[8,128], index: 3, kind: output, shape index: {}]
  %s4 = sld [smem:[#allocation0]]
  $region22: #{ranker_forward.1} parent=0
    _
  %s6 = ssub.s32 1, %s4
  %s7 = scalar_select 0, %s6, %s4
  // Predicated region
  $region2: #{ranker_forward.1} parent=0 // pred_check
    _
  $region3: #{ranker_forward.1} parent=0 // pred_check_branch
    %9 = sbr.rel (0) target = $region5
  $region4: #{ranker_forward.1} parent=0 // pred_region
    _
  $region5: #{ranker_forward.1} parent=0 // pred_fallthru
    _
  // Predicated region
  $region6: #{ranker_forward.1} parent=0 // pred_check
    _
  $region7: #{ranker_forward.1} parent=0 // pred_check_branch
    %11 = sbr.rel (0) target = $region9
  $region8: #{ranker_forward.1} parent=0 // pred_region
    _
  $region9: #{ranker_forward.1} parent=0 // pred_fallthru
    _
  // Predicated region
  $region10: #{ranker_forward.1} parent=0 // pred_check
    _
  $region11: #{ranker_forward.1} parent=0 // pred_check_branch
    %13 = sbr.rel (0) target = $region13
  $region12: #{ranker_forward.1} parent=0 // pred_region
    _
  $region13: #{ranker_forward.1} parent=0 // pred_fallthru
    _
  %v15 = vld [vmem:[%s0] sm:$0xf]
  %v16 = vld [vmem:[%s1] sm:$0xf]
  %v17 = vld [vmem:[%s1 + $0x4] sm:$0xf]
  %v18 = vld [vmem:[%s1 + $0x8] sm:$0xf]
  %v19 = vld [vmem:[%s1 + $0xc] sm:$0xf]
  %v20 = vld [vmem:[%s1 + $0x10] sm:$0xf]
  %v21 = vld [vmem:[%s1 + $0x14] sm:$0xf]
  %v22 = vld [vmem:[%s1 + $0x18] sm:$0xf]
  %v23 = vld [vmem:[%s1 + $0x1c] sm:$0xf]
  %v24 = vld [vmem:[%s1 + $0x20] sm:$0xf]
  %v25 = vld [vmem:[%s1 + $0x24] sm:$0xf]
  %v26 = vld [vmem:[%s1 + $0x28] sm:$0xf]
  %v27 = vld [vmem:[%s1 + $0x2c] sm:$0xf]
  %v28 = vld [vmem:[%s1 + $0x30] sm:$0xf]
  %v29 = vld [vmem:[%s1 + $0x34] sm:$0xf]
  %v30 = vld [vmem:[%s1 + $0x38] sm:$0xf]
  %v31 = vld [vmem:[%s1 + $0x3c] sm:$0xf]
  %v32 = vld [vmem:[%s2] sm:$0x1]
  %v34 = vlaneseq
  %v35 = vshrl.u32 %v34, 7
  %v36 = vsub.s32 0, %v35
  %v37 = vrot.slane %v32, %v36
  %v55 = vunpack.c.l.b16 %v16
  %v56 = vunpack.c.l.b16 %v17
  %v57 = vunpack.c.l.b16 %v18
  %v58 = vunpack.c.l.b16 %v19
  %v59 = vunpack.c.l.b16 %v20
  %v60 = vunpack.c.l.b16 %v21
  %v61 = vunpack.c.l.b16 %v22
  %v62 = vunpack.c.l.b16 %v23
  %v63 = vunpack.c.l.b16 %v24
  %v64 = vunpack.c.l.b16 %v25
  %v65 = vunpack.c.l.b16 %v26
  %v66 = vunpack.c.l.b16 %v27
  %v67 = vunpack.c.l.b16 %v28
  %v68 = vunpack.c.l.b16 %v29
  %v69 = vunpack.c.l.b16 %v30
  %v70 = vunpack.c.l.b16 %v31
  %v71 = vpack.c.b16 %v56, %v55
  %v72 = vpack.c.b16 %v58, %v57
  %v73 = vpack.c.b16 %v60, %v59
  %v74 = vpack.c.b16 %v62, %v61
  %v75 = vpack.c.b16 %v64, %v63
  %v76 = vpack.c.b16 %v66, %v65
  %v77 = vpack.c.b16 %v68, %v67
  %v78 = vpack.c.b16 %v70, %v69
  %vm79 = vcmask 195584
  %v81 = vsel %vm79, %v15, 0
  %v84 = vsel %vm79, %v71, 0
  %v87 = vsel %vm79, %v72, 0
  %v90 = vsel %vm79, %v73, 0
  %v93 = vsel %vm79, %v74, 0
  %v96 = vsel %vm79, %v75, 0
  %v99 = vsel %vm79, %v76, 0
  %v102 = vsel %vm79, %v77, 0
  %v105 = vsel %vm79, %v78, 0
  %107 = vmatprep.subr.bf16.mxu0 0
  %108 = vmatpush1.bf16.xpose.msra.mxu0 %v84
  %109 = vmatprep.subr.bf16.mxu0 0
  %110 = vmatpush1.bf16.xpose.msra.mxu0 %v87
  %111 = vmatprep.subr.bf16.mxu0 0
  %112 = vmatpush1.bf16.xpose.msra.mxu0 %v90
  %113 = vmatprep.subr.bf16.mxu0 0
  %114 = vmatpush1.bf16.xpose.msra.mxu0 %v93
  %115 = vmatprep.subr.bf16.mxu0 0
  %116 = vmatpush1.bf16.xpose.msra.mxu0 %v96
  %117 = vmatprep.subr.bf16.mxu0 0
  %118 = vmatpush1.bf16.xpose.msra.mxu0 %v99
  %119 = vmatprep.subr.bf16.mxu0 0
  %120 = vmatpush1.bf16.xpose.msra.mxu0 %v102
  %121 = vmatprep.subr.bf16.mxu0 0
  %122 = vmatpush1.bf16.xpose.msra.mxu0 %v105
  %123 = vmatprep.subr.bf16.mxu0 0
  %124 = vmatpush1.bf16.xpose.msra.mxu0 0
  %125 = vmatprep.subr.bf16.mxu0 0
  %126 = vmatpush1.bf16.xpose.msra.mxu0 0
  %127 = vmatprep.subr.bf16.mxu0 0
  %128 = vmatpush1.bf16.xpose.msra.mxu0 0
  %129 = vmatprep.subr.bf16.mxu0 0
  %130 = vmatpush1.bf16.xpose.msra.mxu0 0
  %131 = vmatprep.subr.bf16.mxu0 0
  %132 = vmatpush1.bf16.xpose.msra.mxu0 0
  %133 = vmatprep.subr.bf16.mxu0 0
  %134 = vmatpush1.bf16.xpose.msra.mxu0 0
  %135 = vmatprep.subr.bf16.mxu0 0
  %136 = vmatpush1.bf16.xpose.msra.mxu0 0
  %137 = vmatprep.subr.bf16.mxu0 0
  %138 = vmatpush1.bf16.xpose.msra.mxu0 0
  %139 = vmatprep.mubr.bf16.mxu0 0
  %140 = vmatmul.mubr.bf16.gmra.mrb[0].mxu0 %v81
  %v141 = vpop.f32.mrb[0].mxu0
  %v142 = vadd.f32 %v37, %v141
  %v143 = vpop.f32.mrb[0].mxu0
  %v144 = vpop.f32.mrb[0].mxu0
  %v145 = vpop.f32.mrb[0].mxu0
  %146 = vdwg.mxu0
  %147 = vst [vmem:[%s3] sm:$0xff] %v142
  // Predicated region
  $region14: #{ranker_forward.1} parent=0 // pred_check
    _
  $region15: #{ranker_forward.1} parent=0 // pred_check_branch
    %149 = sbr.rel (0) target = $region17
  $region16: #{ranker_forward.1} parent=0 // pred_region
    _
  $region17: #{ranker_forward.1} parent=0 // pred_fallthru
    _
  // Predicated region
  $region18: #{ranker_forward.1} parent=0 // pred_check
    _
  $region19: #{ranker_forward.1} parent=0 // pred_check_branch
    %151 = sbr.rel (0) target = $region21
  $region20: #{ranker_forward.1} parent=0 // pred_region
    _
  $region21: #{ranker_forward.1} parent=0 // pred_fallthru
    _

</llo_original>
